<compile_context>
chip_gen: v5e
topology: v5e:2x2
jax: 0.10.0
libtpu: 0.0.40
codegen_flags: <defaults>
</compile_context>

<pallas_src>
import numpy as np
import jax
import jax.numpy as jnp
from jax import lax
from jax.experimental import pallas as pl
from jax.experimental.pallas import tpu as pltpu


def make_rnn_kernel(T, B, H, O):
    H2, H4, H6, H8 = 2 * H, 4 * H, 6 * H, 8 * H

    def kernel(enc_ref, wih_ref, whh_ref, sp_ref, out_ref, rnn_ref):
        # packed small params: row0 bias(8H, pre-scaled), row1 mu(2H), row2 gamma(2H),
        # row3 beta(2H), row4 b2(O), rows 5..5+O-1 w2^T (2H each)
        bias = sp_ref[0:1, :]                                  # (1, 8H)

        # ---- fused input projection: both directions AND both time orders -------
        # enc_ref rows are [enc[s] | enc[T-1-s]] features; wih is block-structured so
        # forward-gate columns read the first Dp features and backward-gate columns
        # read the time-reversed second Dp features.  bf16 x bf16 -> f32.
        gx = jnp.dot(enc_ref[...], wih_ref[...],
                     preferred_element_type=jnp.float32) + bias      # (T*B, 8H)

        whh = whh_ref[...]                                     # (2H, 8H) bf16, block-structured

        # hoisted lane constants (computed once, reused every step)
        lane = lax.broadcasted_iota(jnp.int32, (B, H8), 1)
        g_cols = (lane >= H4) & (lane < H6)                    # tanh-gate lanes
        act_scale = jnp.where(g_cols, 1.0, 0.5).astype(jnp.float32)
        act_shift = jnp.where(g_cols, 0.0, 0.5).astype(jnp.float32)
        lane2 = lax.broadcasted_iota(jnp.int32, (B, H2), 1)
        fwd_half = lane2 < H                                   # forward half of [h_f|h_b]

        # ---- merged, fully unrolled bidirectional recurrence (T static) ----------
        # column layout (interleaved per gate): [i_f|i_b|f_f|f_b|g_f|g_b|o_f|o_b]
        h = jnp.zeros((B, H2), jnp.float32)
        c = jnp.zeros((B, H2), jnp.float32)
        h_steps = []
        for s in range(T):
            g_in = gx[s * B:(s + 1) * B, :]
            if s == 0:
                gates = g_in                                   # h == 0: skip the dot
            else:
                gates = g_in + jnp.dot(h.astype(jnp.bfloat16), whh,
                                       preferred_element_type=jnp.float32)
            # single EUP push: sigmoid lanes already pre-scaled by 0.5 in the weights
            t_all = jnp.tanh(gates)
            act = t_all * act_scale + act_shift
            i = act[:, 0:H2]
            f = act[:, H2:H4]
            g = act[:, H4:H6]
            o = act[:, H6:H8]
            c = i * g if s == 0 else f * c + i * g
            h = o * jnp.tanh(c)
            h_steps.append(h)                                  # stays in vregs

        # ---- bidirectional time reorder ONCE, after the loop ---------------------
        for t in range(T):
            rnn_ref[t] = jnp.where(fwd_half, h_steps[t], h_steps[T - 1 - t])
        rnn_out = rnn_ref[...]                                 # (T, B, 2H)

        # ---- attention: VPU mul + lane reduce, softmax over time -----------------
        mu_row = sp_ref[1:2, 0:H2]                             # (1, 2H)
        attn = jnp.sum(rnn_out * mu_row, axis=-1, keepdims=True)     # (T, B, 1)
        m = jnp.max(attn, axis=0, keepdims=True)
        e = jnp.exp(attn - m)
        soft = e / jnp.sum(e, axis=0, keepdims=True)           # exact divide
        context = jnp.sum(rnn_out * soft, axis=0)              # (B, 2H)

        # ---- BatchNorm1d (training mode: biased batch stats), ReLU, Linear -------
        mean = jnp.mean(context, axis=0, keepdims=True)
        var = jnp.mean((context - mean) ** 2, axis=0, keepdims=True)
        y = (context - mean) * lax.rsqrt(var + 1e-5)
        y = y * sp_ref[2:3, 0:H2] + sp_ref[3:4, 0:H2]
        y = jnp.maximum(y, 0.0)

        w2t = sp_ref[5:5 + O, 0:H2]                            # (O, 2H)
        b2 = sp_ref[4:5, 0:O]                                  # (1, O)
        if O == 1:
            out_ref[...] = jnp.sum(y * w2t, axis=-1, keepdims=True) + b2
        else:
            out_ref[...] = lax.dot_general(
                y, w2t, (((1,), (1,)), ((), ())),
                preferred_element_type=jnp.float32) + b2

    return kernel


def rnn_forward_pallas(enc_tbd, p):
    T, B, D = enc_tbd.shape
    H = p['whh_f'].shape[0]
    O = p['w2'].shape[1]
    H2, H8 = 2 * H, 8 * H
    Dp = ((D + 7) // 8) * 8                                    # pad feature dim (25 -> 32)

    # ---- build fused / block-structured weights (trace-time glue) ----------------
    def pad_rows(w):                                           # (D, H) -> (Dp, H)
        return jnp.pad(w, ((0, Dp - D), (0, 0)))

    zDp = jnp.zeros((Dp, H), jnp.float32)
    zH = jnp.zeros((H, H), jnp.float32)
    wih_cols, whh_cols, b_cols = [], [], []
    for k in range(4):                                         # PyTorch gate order i,f,g,o
        wf = pad_rows(p['wih_f'][:, k * H:(k + 1) * H])
        wb = pad_rows(p['wih_b'][:, k * H:(k + 1) * H])
        wih_cols.append(jnp.concatenate([wf, zDp], axis=0))    # fwd cols read first Dp feats
        wih_cols.append(jnp.concatenate([zDp, wb], axis=0))    # bwd cols read reversed feats
        whh_cols.append(jnp.concatenate([p['whh_f'][:, k * H:(k + 1) * H], zH], axis=0))
        whh_cols.append(jnp.concatenate([zH, p['whh_b'][:, k * H:(k + 1) * H]], axis=0))
        b_cols.append(p['b_f'][:, k * H:(k + 1) * H])
        b_cols.append(p['b_b'][:, k * H:(k + 1) * H])
    wih_blk = jnp.concatenate(wih_cols, axis=1)                # (2Dp, 8H)
    whh_blk = jnp.concatenate(whh_cols, axis=1)                # (2H, 8H)
    b_cat = jnp.concatenate(b_cols, axis=1)                    # (1, 8H)

    # fold sigmoid(x)=0.5*tanh(x/2)+0.5 pre-scale into i/f/o gate columns (exact in bf16)
    colv = jnp.arange(H8)
    col_scale = jnp.where((colv >= 4 * H) & (colv < 6 * H), 1.0, 0.5).astype(jnp.float32)
    wih_bf = (wih_blk * col_scale).astype(jnp.bfloat16)
    whh_bf = (whh_blk * col_scale).astype(jnp.bfloat16)
    b_scaled = b_cat * col_scale

    # encoder input stacked with its time-reversal, flattened to 2-D in the wrapper
    enc_pad = jnp.pad(enc_tbd, ((0, 0), (0, 0), (0, Dp - D)))
    enc_cat = jnp.concatenate([enc_pad, enc_pad[::-1]], axis=-1)   # (T, B, 2Dp)
    enc_cat = enc_cat.reshape(T * B, 2 * Dp).astype(jnp.bfloat16)

    # pack all small parameters into a single (5+O, 8H) buffer (one DMA)
    def row(v):
        return jnp.pad(v, ((0, 0), (0, H8 - v.shape[1])))

    sp = jnp.concatenate(
        [row(b_scaled), row(p['mu'].T), row(p['gamma']),
         row(p['beta']), row(p['b2']), row(p['w2'].T)], axis=0)    # (5+O, 8H)

    vmem = pl.BlockSpec(memory_space=pltpu.MemorySpace.VMEM)
    return pl.pallas_call(
        make_rnn_kernel(T, B, H, O),
        out_shape=jax.ShapeDtypeStruct((B, O), jnp.float32),
        in_specs=[vmem] * 4,
        out_specs=vmem,
        scratch_shapes=[pltpu.VMEM((T, B, H2), jnp.float32)],  # bidirectional hidden history
    )(enc_cat, wih_bf, whh_bf, sp)


def rnn_forward_ref(enc_tbd, p):
    """Pure-JAX f32 reference of the same forward math (classic per-direction layout)."""
    T, B, _ = enc_tbd.shape
    H = p['whh_f'].shape[0]

    def cell(gx, h, c, whh):
        gates = gx + h @ whh
        i = jax.nn.sigmoid(gates[:, :H])
        f = jax.nn.sigmoid(gates[:, H:2 * H])
        g = jnp.tanh(gates[:, 2 * H:3 * H])
        o = jax.nn.sigmoid(gates[:, 3 * H:])
        c = f * c + i * g
        h = o * jnp.tanh(c)
        return h, c

    gx_f = enc_tbd @ p['wih_f'] + p['b_f']
    gx_b = enc_tbd @ p['wih_b'] + p['b_b']
    h = c = jnp.zeros((B, H), jnp.float32)
    hf = []
    for t in range(T):
        h, c = cell(gx_f[t], h, c, p['whh_f'])
        hf.append(h)
    h = c = jnp.zeros((B, H), jnp.float32)
    hb = [None] * T
    for t in range(T - 1, -1, -1):
        h, c = cell(gx_b[t], h, c, p['whh_b'])
        hb[t] = h
    rnn_out = jnp.concatenate([jnp.stack(hf), jnp.stack(hb)], axis=-1)  # (T,B,2H)
    attn = rnn_out @ p['mu']                                            # (T,B,1)
    soft = jax.nn.softmax(attn, axis=0)
    context = jnp.sum(rnn_out * soft, axis=0)                           # (B,2H)
    mean = context.mean(0, keepdims=True)
    var = ((context - mean) ** 2).mean(0, keepdims=True)
    y = (context - mean) / jnp.sqrt(var + 1e-5) * p['gamma'] + p['beta']
    y = jnp.maximum(y, 0.0)
    return y @ p['w2'] + p['b2']


def init_params(key, D, H, O):
    ks = jax.random.split(key, 9)
    s = 1.0 / float(np.sqrt(H))
    u = lambda k, shape: jax.random.uniform(k, shape, jnp.float32, -s, s)
    return dict(
        wih_f=u(ks[0], (D, 4 * H)), whh_f=u(ks[1], (H, 4 * H)), b_f=u(ks[2], (1, 4 * H)),
        wih_b=u(ks[3], (D, 4 * H)), whh_b=u(ks[4], (H, 4 * H)), b_b=u(ks[5], (1, 4 * H)),
        mu=u(ks[6], (2 * H, 1)),                       # weight_Mu (uninit in torch -> init here)
        gamma=jnp.ones((1, 2 * H), jnp.float32),       # BatchNorm1d affine init
        beta=jnp.zeros((1, 2 * H), jnp.float32),
        w2=u(ks[7], (2 * H, O)), b2=u(ks[8], (1, O)),
    )


if __name__ == "__main__":
    B, T, H, O = 8, 8, 8, 1                 # B=8 fills all 8 sublanes of the state tiles
    min_max = [0, 1]                        # which float columns are the "time_stamp"
    n_activity, n_worker, n_station = 10, 10, 10

    key = jax.random.PRNGKey(0)
    k1, k2, k3, k4, k5, k6, kp, ke = jax.random.split(key, 8)

    # build a (B, T, 7) input: cols 0,1 float features; cols 2,3,5,6 integer ids
    ts_cols = jax.random.normal(k1, (B, T, 2), jnp.float32)
    wd_ids = jax.random.randint(k2, (B, T), 0, 8).astype(jnp.float32)
    act_ids = jax.random.randint(k3, (B, T), 0, n_activity).astype(jnp.float32)
    col4 = jax.random.normal(k4, (B, T), jnp.float32)
    wk_ids = jax.random.randint(k5, (B, T), 0, n_worker).astype(jnp.float32)
    st_ids = jax.random.randint(k6, (B, T), 0, n_station).astype(jnp.float32)
    x = jnp.concatenate([ts_cols, wd_ids[..., None], act_ids[..., None],
                         col4[..., None], wk_ids[..., None], st_ids[..., None]], axis=-1)

    # embedding tables (padding_idx=0 -> zero row), glue in plain JAX
    ek = jax.random.split(ke, 4)
    def emb_table(k, n, d):
        return jax.random.normal(k, (n, d), jnp.float32).at[0].set(0.0)
    weekday_emb = emb_table(ek[0], 7 + 1, 5)
    activity_emb = emb_table(ek[1], n_activity, 6)
    worker_emb = emb_table(ek[2], n_worker, 6)
    station_emb = emb_table(ek[3], n_station, 6)

    time_stamp = x[:, :, jnp.array(min_max)]
    weekday = weekday_emb[x[:, :, 2].astype(jnp.int32)]
    activity = activity_emb[x[:, :, 3].astype(jnp.int32)]
    worker = worker_emb[x[:, :, 5].astype(jnp.int32)]
    station = station_emb[x[:, :, 6].astype(jnp.int32)]
    enc = jnp.concatenate([time_stamp, weekday, activity, worker, station],
                          axis=-1).astype(jnp.float32)        # (B, T, D), D = 2+5+6+6+6 = 25
    enc_tbd = jnp.transpose(enc, (1, 0, 2))                   # time-major (T, B, D)

    D = enc.shape[-1]
    params = init_params(kp, D, H, O)

    out = rnn_forward_pallas(enc_tbd, params)
    out = jax.block_until_ready(out)

    ref = rnn_forward_ref(enc_tbd, params)
    # Tolerance note: kernel uses bf16 MXU operands (f32 accumulation) and the
    # training-mode BatchNorm divides by the batch std, which amplifies small
    # rounding differences; bounds chosen so structural bugs (O(0.1..1) errors)
    # would still fail.
    np.testing.assert_allclose(np.asarray(out), np.asarray(ref), rtol=2e-2, atol=5e-2)

    # TODO(synk): nn.Dropout(p=0.1) is constructed in __init__ but never used in
    # forward(), and BatchNorm running-stat buffer updates have no effect on the
    # output of a single forward pass, so neither is implemented.
    print("KERNEL_OK")
</pallas_src>

<mosaic_0001>
module attributes {stable_mosaic.version = 11 : i64} {
  func.func @kernel(%arg0: memref<64x64xbf16, #tpu.memory_space<vmem>>, %arg1: memref<64x64xbf16, #tpu.memory_space<vmem>>, %arg2: memref<16x64xbf16, #tpu.memory_space<vmem>>, %arg3: memref<6x64xf32, #tpu.memory_space<vmem>>, %arg4: memref<8x1xf32, #tpu.memory_space<vmem>>, %arg5: memref<8x8x16xf32, #tpu.memory_space<vmem>>) attributes {dimension_semantics = [], scalar_prefetch = 0 : i64, scratch_operands = 1 : i64, tpu.core_type = #tpu.core_type<tc>} {
    %c0 = arith.constant 0 : index
    %c0_0 = arith.constant 0 : index
    %0 = vector.load %arg3[%c0, %c0_0] : memref<6x64xf32, #tpu.memory_space<vmem>>, vector<1x64xf32>
    %c0_1 = arith.constant 0 : index
    %c0_2 = arith.constant 0 : index
    %1 = vector.load %arg0[%c0_1, %c0_2] : memref<64x64xbf16, #tpu.memory_space<vmem>>, vector<64x64xbf16>
    %c0_3 = arith.constant 0 : index
    %c0_4 = arith.constant 0 : index
    %2 = vector.load %arg1[%c0_3, %c0_4] : memref<64x64xbf16, #tpu.memory_space<vmem>>, vector<64x64xbf16>
    %cst = arith.constant dense<0.000000e+00> : vector<64x64xf32>
    %3 = tpu.matmul %1, %2, %cst {dimension_numbers = #tpu.dot_dimension_numbers<[1], [0], [0], [1], [0, 0, 1, 1], [], []>} : vector<64x64xbf16>, vector<64x64xbf16>, vector<64x64xf32> -> vector<64x64xf32>
    %4 = vector.broadcast %0 : vector<1x64xf32> to vector<64x64xf32>
    %5 = arith.addf %3, %4 : vector<64x64xf32>
    %c0_5 = arith.constant 0 : index
    %c0_6 = arith.constant 0 : index
    %6 = vector.load %arg2[%c0_5, %c0_6] : memref<16x64xbf16, #tpu.memory_space<vmem>>, vector<16x64xbf16>
    %7 = tpu.iota {dimensions = array<i32: 1>} : vector<8x64xi32>
    %c32_i32 = arith.constant 32 : i32
    %8 = vector.broadcast %c32_i32 : i32 to vector<8x64xi32>
    %9 = arith.cmpi sge, %7, %8 : vector<8x64xi32>
    %c48_i32 = arith.constant 48 : i32
    %10 = vector.broadcast %c48_i32 : i32 to vector<8x64xi32>
    %11 = arith.cmpi slt, %7, %10 : vector<8x64xi32>
    %12 = arith.andi %9, %11 : vector<8x64xi1>
    %cst_7 = arith.constant 1.000000e+00 : f32
    %cst_8 = arith.constant 5.000000e-01 : f32
    %13 = vector.broadcast %cst_7 : f32 to vector<8x64xf32>
    %14 = vector.broadcast %cst_8 : f32 to vector<8x64xf32>
    %15 = arith.select %12, %13, %14 : vector<8x64xi1>, vector<8x64xf32>
    %cst_9 = arith.constant 0.000000e+00 : f32
    %cst_10 = arith.constant 5.000000e-01 : f32
    %16 = vector.broadcast %cst_9 : f32 to vector<8x64xf32>
    %17 = vector.broadcast %cst_10 : f32 to vector<8x64xf32>
    %18 = arith.select %12, %16, %17 : vector<8x64xi1>, vector<8x64xf32>
    %19 = tpu.iota {dimensions = array<i32: 1>} : vector<8x16xi32>
    %c8_i32 = arith.constant 8 : i32
    %20 = vector.broadcast %c8_i32 : i32 to vector<8x16xi32>
    %21 = arith.cmpi slt, %19, %20 : vector<8x16xi32>
    %22 = vector.extract_strided_slice %5 {offsets = [0, 0], sizes = [8, 64], strides = [1, 1]} : vector<64x64xf32> to vector<8x64xf32>
    %23 = math.tanh %22 : vector<8x64xf32>
    %24 = arith.mulf %23, %15 : vector<8x64xf32>
    %25 = arith.addf %24, %18 : vector<8x64xf32>
    %26 = vector.extract_strided_slice %25 {offsets = [0, 0], sizes = [8, 16], strides = [1, 1]} : vector<8x64xf32> to vector<8x16xf32>
    %27 = vector.extract_strided_slice %25 {offsets = [0, 32], sizes = [8, 16], strides = [1, 1]} : vector<8x64xf32> to vector<8x16xf32>
    %28 = vector.extract_strided_slice %25 {offsets = [0, 48], sizes = [8, 16], strides = [1, 1]} : vector<8x64xf32> to vector<8x16xf32>
    %29 = arith.mulf %26, %27 : vector<8x16xf32>
    %30 = math.tanh %29 : vector<8x16xf32>
    %31 = arith.mulf %28, %30 : vector<8x16xf32>
    %32 = vector.extract_strided_slice %5 {offsets = [8, 0], sizes = [8, 64], strides = [1, 1]} : vector<64x64xf32> to vector<8x64xf32>
    %33 = arith.truncf %31 : vector<8x16xf32> to vector<8x16xbf16>
    %cst_11 = arith.constant dense<0.000000e+00> : vector<8x64xf32>
    %34 = tpu.matmul %33, %6, %cst_11 {dimension_numbers = #tpu.dot_dimension_numbers<[1], [0], [0], [1], [0, 0, 1, 1], [], []>} : vector<8x16xbf16>, vector<16x64xbf16>, vector<8x64xf32> -> vector<8x64xf32>
    %35 = arith.addf %32, %34 : vector<8x64xf32>
    %36 = math.tanh %35 : vector<8x64xf32>
    %37 = arith.mulf %36, %15 : vector<8x64xf32>
    %38 = arith.addf %37, %18 : vector<8x64xf32>
    %39 = vector.extract_strided_slice %38 {offsets = [0, 0], sizes = [8, 16], strides = [1, 1]} : vector<8x64xf32> to vector<8x16xf32>
    %40 = vector.extract_strided_slice %38 {offsets = [0, 16], sizes = [8, 16], strides = [1, 1]} : vector<8x64xf32> to vector<8x16xf32>
    %41 = vector.extract_strided_slice %38 {offsets = [0, 32], sizes = [8, 16], strides = [1, 1]} : vector<8x64xf32> to vector<8x16xf32>
    %42 = vector.extract_strided_slice %38 {offsets = [0, 48], sizes = [8, 16], strides = [1, 1]} : vector<8x64xf32> to vector<8x16xf32>
    %43 = arith.mulf %40, %29 : vector<8x16xf32>
    %44 = arith.mulf %39, %41 : vector<8x16xf32>
    %45 = arith.addf %43, %44 : vector<8x16xf32>
    %46 = math.tanh %45 : vector<8x16xf32>
    %47 = arith.mulf %42, %46 : vector<8x16xf32>
    %48 = vector.extract_strided_slice %5 {offsets = [16, 0], sizes = [8, 64], strides = [1, 1]} : vector<64x64xf32> to vector<8x64xf32>
    %49 = arith.truncf %47 : vector<8x16xf32> to vector<8x16xbf16>
    %cst_12 = arith.constant dense<0.000000e+00> : vector<8x64xf32>
    %50 = tpu.matmul %49, %6, %cst_12 {dimension_numbers = #tpu.dot_dimension_numbers<[1], [0], [0], [1], [0, 0, 1, 1], [], []>} : vector<8x16xbf16>, vector<16x64xbf16>, vector<8x64xf32> -> vector<8x64xf32>
    %51 = arith.addf %48, %50 : vector<8x64xf32>
    %52 = math.tanh %51 : vector<8x64xf32>
    %53 = arith.mulf %52, %15 : vector<8x64xf32>
    %54 = arith.addf %53, %18 : vector<8x64xf32>
    %55 = vector.extract_strided_slice %54 {offsets = [0, 0], sizes = [8, 16], strides = [1, 1]} : vector<8x64xf32> to vector<8x16xf32>
    %56 = vector.extract_strided_slice %54 {offsets = [0, 16], sizes = [8, 16], strides = [1, 1]} : vector<8x64xf32> to vector<8x16xf32>
    %57 = vector.extract_strided_slice %54 {offsets = [0, 32], sizes = [8, 16], strides = [1, 1]} : vector<8x64xf32> to vector<8x16xf32>
    %58 = vector.extract_strided_slice %54 {offsets = [0, 48], sizes = [8, 16], strides = [1, 1]} : vector<8x64xf32> to vector<8x16xf32>
    %59 = arith.mulf %56, %45 : vector<8x16xf32>
    %60 = arith.mulf %55, %57 : vector<8x16xf32>
    %61 = arith.addf %59, %60 : vector<8x16xf32>
    %62 = math.tanh %61 : vector<8x16xf32>
    %63 = arith.mulf %58, %62 : vector<8x16xf32>
    %64 = vector.extract_strided_slice %5 {offsets = [24, 0], sizes = [8, 64], strides = [1, 1]} : vector<64x64xf32> to vector<8x64xf32>
    %65 = arith.truncf %63 : vector<8x16xf32> to vector<8x16xbf16>
    %cst_13 = arith.constant dense<0.000000e+00> : vector<8x64xf32>
    %66 = tpu.matmul %65, %6, %cst_13 {dimension_numbers = #tpu.dot_dimension_numbers<[1], [0], [0], [1], [0, 0, 1, 1], [], []>} : vector<8x16xbf16>, vector<16x64xbf16>, vector<8x64xf32> -> vector<8x64xf32>
    %67 = arith.addf %64, %66 : vector<8x64xf32>
    %68 = math.tanh %67 : vector<8x64xf32>
    %69 = arith.mulf %68, %15 : vector<8x64xf32>
    %70 = arith.addf %69, %18 : vector<8x64xf32>
    %71 = vector.extract_strided_slice %70 {offsets = [0, 0], sizes = [8, 16], strides = [1, 1]} : vector<8x64xf32> to vector<8x16xf32>
    %72 = vector.extract_strided_slice %70 {offsets = [0, 16], sizes = [8, 16], strides = [1, 1]} : vector<8x64xf32> to vector<8x16xf32>
    %73 = vector.extract_strided_slice %70 {offsets = [0, 32], sizes = [8, 16], strides = [1, 1]} : vector<8x64xf32> to vector<8x16xf32>
    %74 = vector.extract_strided_slice %70 {offsets = [0, 48], sizes = [8, 16], strides = [1, 1]} : vector<8x64xf32> to vector<8x16xf32>
    %75 = arith.mulf %72, %61 : vector<8x16xf32>
    %76 = arith.mulf %71, %73 : vector<8x16xf32>
    %77 = arith.addf %75, %76 : vector<8x16xf32>
    %78 = math.tanh %77 : vector<8x16xf32>
    %79 = arith.mulf %74, %78 : vector<8x16xf32>
    %80 = vector.extract_strided_slice %5 {offsets = [32, 0], sizes = [8, 64], strides = [1, 1]} : vector<64x64xf32> to vector<8x64xf32>
    %81 = arith.truncf %79 : vector<8x16xf32> to vector<8x16xbf16>
    %cst_14 = arith.constant dense<0.000000e+00> : vector<8x64xf32>
    %82 = tpu.matmul %81, %6, %cst_14 {dimension_numbers = #tpu.dot_dimension_numbers<[1], [0], [0], [1], [0, 0, 1, 1], [], []>} : vector<8x16xbf16>, vector<16x64xbf16>, vector<8x64xf32> -> vector<8x64xf32>
    %83 = arith.addf %80, %82 : vector<8x64xf32>
    %84 = math.tanh %83 : vector<8x64xf32>
    %85 = arith.mulf %84, %15 : vector<8x64xf32>
    %86 = arith.addf %85, %18 : vector<8x64xf32>
    %87 = vector.extract_strided_slice %86 {offsets = [0, 0], sizes = [8, 16], strides = [1, 1]} : vector<8x64xf32> to vector<8x16xf32>
    %88 = vector.extract_strided_slice %86 {offsets = [0, 16], sizes = [8, 16], strides = [1, 1]} : vector<8x64xf32> to vector<8x16xf32>
    %89 = vector.extract_strided_slice %86 {offsets = [0, 32], sizes = [8, 16], strides = [1, 1]} : vector<8x64xf32> to vector<8x16xf32>
    %90 = vector.extract_strided_slice %86 {offsets = [0, 48], sizes = [8, 16], strides = [1, 1]} : vector<8x64xf32> to vector<8x16xf32>
    %91 = arith.mulf %88, %77 : vector<8x16xf32>
    %92 = arith.mulf %87, %89 : vector<8x16xf32>
    %93 = arith.addf %91, %92 : vector<8x16xf32>
    %94 = math.tanh %93 : vector<8x16xf32>
    %95 = arith.mulf %90, %94 : vector<8x16xf32>
    %96 = vector.extract_strided_slice %5 {offsets = [40, 0], sizes = [8, 64], strides = [1, 1]} : vector<64x64xf32> to vector<8x64xf32>
    %97 = arith.truncf %95 : vector<8x16xf32> to vector<8x16xbf16>
    %cst_15 = arith.constant dense<0.000000e+00> : vector<8x64xf32>
    %98 = tpu.matmul %97, %6, %cst_15 {dimension_numbers = #tpu.dot_dimension_numbers<[1], [0], [0], [1], [0, 0, 1, 1], [], []>} : vector<8x16xbf16>, vector<16x64xbf16>, vector<8x64xf32> -> vector<8x64xf32>
    %99 = arith.addf %96, %98 : vector<8x64xf32>
    %100 = math.tanh %99 : vector<8x64xf32>
    %101 = arith.mulf %100, %15 : vector<8x64xf32>
    %102 = arith.addf %101, %18 : vector<8x64xf32>
    %103 = vector.extract_strided_slice %102 {offsets = [0, 0], sizes = [8, 16], strides = [1, 1]} : vector<8x64xf32> to vector<8x16xf32>
    %104 = vector.extract_strided_slice %102 {offsets = [0, 16], sizes = [8, 16], strides = [1, 1]} : vector<8x64xf32> to vector<8x16xf32>
    %105 = vector.extract_strided_slice %102 {offsets = [0, 32], sizes = [8, 16], strides = [1, 1]} : vector<8x64xf32> to vector<8x16xf32>
    %106 = vector.extract_strided_slice %102 {offsets = [0, 48], sizes = [8, 16], strides = [1, 1]} : vector<8x64xf32> to vector<8x16xf32>
    %107 = arith.mulf %104, %93 : vector<8x16xf32>
    %108 = arith.mulf %103, %105 : vector<8x16xf32>
    %109 = arith.addf %107, %108 : vector<8x16xf32>
    %110 = math.tanh %109 : vector<8x16xf32>
    %111 = arith.mulf %106, %110 : vector<8x16xf32>
    %112 = vector.extract_strided_slice %5 {offsets = [48, 0], sizes = [8, 64], strides = [1, 1]} : vector<64x64xf32> to vector<8x64xf32>
    %113 = arith.truncf %111 : vector<8x16xf32> to vector<8x16xbf16>
    %cst_16 = arith.constant dense<0.000000e+00> : vector<8x64xf32>
    %114 = tpu.matmul %113, %6, %cst_16 {dimension_numbers = #tpu.dot_dimension_numbers<[1], [0], [0], [1], [0, 0, 1, 1], [], []>} : vector<8x16xbf16>, vector<16x64xbf16>, vector<8x64xf32> -> vector<8x64xf32>
    %115 = arith.addf %112, %114 : vector<8x64xf32>
    %116 = math.tanh %115 : vector<8x64xf32>
    %117 = arith.mulf %116, %15 : vector<8x64xf32>
    %118 = arith.addf %117, %18 : vector<8x64xf32>
    %119 = vector.extract_strided_slice %118 {offsets = [0, 0], sizes = [8, 16], strides = [1, 1]} : vector<8x64xf32> to vector<8x16xf32>
    %120 = vector.extract_strided_slice %118 {offsets = [0, 16], sizes = [8, 16], strides = [1, 1]} : vector<8x64xf32> to vector<8x16xf32>
    %121 = vector.extract_strided_slice %118 {offsets = [0, 32], sizes = [8, 16], strides = [1, 1]} : vector<8x64xf32> to vector<8x16xf32>
    %122 = vector.extract_strided_slice %118 {offsets = [0, 48], sizes = [8, 16], strides = [1, 1]} : vector<8x64xf32> to vector<8x16xf32>
    %123 = arith.mulf %120, %109 : vector<8x16xf32>
    %124 = arith.mulf %119, %121 : vector<8x16xf32>
    %125 = arith.addf %123, %124 : vector<8x16xf32>
    %126 = math.tanh %125 : vector<8x16xf32>
    %127 = arith.mulf %122, %126 : vector<8x16xf32>
    %128 = vector.extract_strided_slice %5 {offsets = [56, 0], sizes = [8, 64], strides = [1, 1]} : vector<64x64xf32> to vector<8x64xf32>
    %129 = arith.truncf %127 : vector<8x16xf32> to vector<8x16xbf16>
    %cst_17 = arith.constant dense<0.000000e+00> : vector<8x64xf32>
    %130 = tpu.matmul %129, %6, %cst_17 {dimension_numbers = #tpu.dot_dimension_numbers<[1], [0], [0], [1], [0, 0, 1, 1], [], []>} : vector<8x16xbf16>, vector<16x64xbf16>, vector<8x64xf32> -> vector<8x64xf32>
    %131 = arith.addf %128, %130 : vector<8x64xf32>
    %132 = math.tanh %131 : vector<8x64xf32>
    %133 = arith.mulf %132, %15 : vector<8x64xf32>
    %134 = arith.addf %133, %18 : vector<8x64xf32>
    %135 = vector.extract_strided_slice %134 {offsets = [0, 0], sizes = [8, 16], strides = [1, 1]} : vector<8x64xf32> to vector<8x16xf32>
    %136 = vector.extract_strided_slice %134 {offsets = [0, 16], sizes = [8, 16], strides = [1, 1]} : vector<8x64xf32> to vector<8x16xf32>
    %137 = vector.extract_strided_slice %134 {offsets = [0, 32], sizes = [8, 16], strides = [1, 1]} : vector<8x64xf32> to vector<8x16xf32>
    %138 = vector.extract_strided_slice %134 {offsets = [0, 48], sizes = [8, 16], strides = [1, 1]} : vector<8x64xf32> to vector<8x16xf32>
    %139 = arith.mulf %136, %125 : vector<8x16xf32>
    %140 = arith.mulf %135, %137 : vector<8x16xf32>
    %141 = arith.addf %139, %140 : vector<8x16xf32>
    %142 = math.tanh %141 : vector<8x16xf32>
    %143 = arith.mulf %138, %142 : vector<8x16xf32>
    %144 = arith.select %21, %31, %143 : vector<8x16xi1>, vector<8x16xf32>
    %c0_18 = arith.constant 0 : index
    %c0_19 = arith.constant 0 : index
    %c0_20 = arith.constant 0 : index
    %145 = vector.load %arg5[%c0_18, %c0_19, %c0_20] : memref<8x8x16xf32, #tpu.memory_space<vmem>>, vector<1x8x16xf32>
    %146 = vector.shape_cast %145 : vector<1x8x16xf32> to vector<8x16xf32>
    %147 = vector.shape_cast %144 : vector<8x16xf32> to vector<1x8x16xf32>
    tpu.vector_store %arg5[%c0_18, %c0_19, %c0_20], %147 {strides = array<i32>} : memref<8x8x16xf32, #tpu.memory_space<vmem>>, vector<1x8x16xf32>,
    %148 = arith.select %21, %47, %127 : vector<8x16xi1>, vector<8x16xf32>
    %c1 = arith.constant 1 : index
    %c0_21 = arith.constant 0 : index
    %c0_22 = arith.constant 0 : index
    %149 = vector.load %arg5[%c1, %c0_21, %c0_22] : memref<8x8x16xf32, #tpu.memory_space<vmem>>, vector<1x8x16xf32>
    %150 = vector.shape_cast %149 : vector<1x8x16xf32> to vector<8x16xf32>
    %151 = vector.shape_cast %148 : vector<8x16xf32> to vector<1x8x16xf32>
    tpu.vector_store %arg5[%c1, %c0_21, %c0_22], %151 {strides = array<i32>} : memref<8x8x16xf32, #tpu.memory_space<vmem>>, vector<1x8x16xf32>,
    %152 = arith.select %21, %63, %111 : vector<8x16xi1>, vector<8x16xf32>
    %c2 = arith.constant 2 : index
    %c0_23 = arith.constant 0 : index
    %c0_24 = arith.constant 0 : index
    %153 = vector.load %arg5[%c2, %c0_23, %c0_24] : memref<8x8x16xf32, #tpu.memory_space<vmem>>, vector<1x8x16xf32>
    %154 = vector.shape_cast %153 : vector<1x8x16xf32> to vector<8x16xf32>
    %155 = vector.shape_cast %152 : vector<8x16xf32> to vector<1x8x16xf32>
    tpu.vector_store %arg5[%c2, %c0_23, %c0_24], %155 {strides = array<i32>} : memref<8x8x16xf32, #tpu.memory_space<vmem>>, vector<1x8x16xf32>,
    %156 = arith.select %21, %79, %95 : vector<8x16xi1>, vector<8x16xf32>
    %c3 = arith.constant 3 : index
    %c0_25 = arith.constant 0 : index
    %c0_26 = arith.constant 0 : index
    %157 = vector.load %arg5[%c3, %c0_25, %c0_26] : memref<8x8x16xf32, #tpu.memory_space<vmem>>, vector<1x8x16xf32>
    %158 = vector.shape_cast %157 : vector<1x8x16xf32> to vector<8x16xf32>
    %159 = vector.shape_cast %156 : vector<8x16xf32> to vector<1x8x16xf32>
    tpu.vector_store %arg5[%c3, %c0_25, %c0_26], %159 {strides = array<i32>} : memref<8x8x16xf32, #tpu.memory_space<vmem>>, vector<1x8x16xf32>,
    %160 = arith.select %21, %95, %79 : vector<8x16xi1>, vector<8x16xf32>
    %c4 = arith.constant 4 : index
    %c0_27 = arith.constant 0 : index
    %c0_28 = arith.constant 0 : index
    %161 = vector.load %arg5[%c4, %c0_27, %c0_28] : memref<8x8x16xf32, #tpu.memory_space<vmem>>, vector<1x8x16xf32>
    %162 = vector.shape_cast %161 : vector<1x8x16xf32> to vector<8x16xf32>
    %163 = vector.shape_cast %160 : vector<8x16xf32> to vector<1x8x16xf32>
    tpu.vector_store %arg5[%c4, %c0_27, %c0_28], %163 {strides = array<i32>} : memref<8x8x16xf32, #tpu.memory_space<vmem>>, vector<1x8x16xf32>,
    %164 = arith.select %21, %111, %63 : vector<8x16xi1>, vector<8x16xf32>
    %c5 = arith.constant 5 : index
    %c0_29 = arith.constant 0 : index
    %c0_30 = arith.constant 0 : index
    %165 = vector.load %arg5[%c5, %c0_29, %c0_30] : memref<8x8x16xf32, #tpu.memory_space<vmem>>, vector<1x8x16xf32>
    %166 = vector.shape_cast %165 : vector<1x8x16xf32> to vector<8x16xf32>
    %167 = vector.shape_cast %164 : vector<8x16xf32> to vector<1x8x16xf32>
    tpu.vector_store %arg5[%c5, %c0_29, %c0_30], %167 {strides = array<i32>} : memref<8x8x16xf32, #tpu.memory_space<vmem>>, vector<1x8x16xf32>,
    %168 = arith.select %21, %127, %47 : vector<8x16xi1>, vector<8x16xf32>
    %c6 = arith.constant 6 : index
    %c0_31 = arith.constant 0 : index
    %c0_32 = arith.constant 0 : index
    %169 = vector.load %arg5[%c6, %c0_31, %c0_32] : memref<8x8x16xf32, #tpu.memory_space<vmem>>, vector<1x8x16xf32>
    %170 = vector.shape_cast %169 : vector<1x8x16xf32> to vector<8x16xf32>
    %171 = vector.shape_cast %168 : vector<8x16xf32> to vector<1x8x16xf32>
    tpu.vector_store %arg5[%c6, %c0_31, %c0_32], %171 {strides = array<i32>} : memref<8x8x16xf32, #tpu.memory_space<vmem>>, vector<1x8x16xf32>,
    %172 = arith.select %21, %143, %31 : vector<8x16xi1>, vector<8x16xf32>
    %c7 = arith.constant 7 : index
    %c0_33 = arith.constant 0 : index
    %c0_34 = arith.constant 0 : index
    %173 = vector.load %arg5[%c7, %c0_33, %c0_34] : memref<8x8x16xf32, #tpu.memory_space<vmem>>, vector<1x8x16xf32>
    %174 = vector.shape_cast %173 : vector<1x8x16xf32> to vector<8x16xf32>
    %175 = vector.shape_cast %172 : vector<8x16xf32> to vector<1x8x16xf32>
    tpu.vector_store %arg5[%c7, %c0_33, %c0_34], %175 {strides = array<i32>} : memref<8x8x16xf32, #tpu.memory_space<vmem>>, vector<1x8x16xf32>,
    %c0_35 = arith.constant 0 : index
    %c0_36 = arith.constant 0 : index
    %c0_37 = arith.constant 0 : index
    %176 = vector.load %arg5[%c0_35, %c0_36, %c0_37] : memref<8x8x16xf32, #tpu.memory_space<vmem>>, vector<8x8x16xf32>
    %c1_38 = arith.constant 1 : index
    %c0_39 = arith.constant 0 : index
    %177 = vector.load %arg3[%c1_38, %c0_39] : memref<6x64xf32, #tpu.memory_space<vmem>>, vector<1x16xf32>
    %178 = vector.shape_cast %177 : vector<1x16xf32> to vector<1x1x16xf32>
    %179 = vector.broadcast %178 : vector<1x1x16xf32> to vector<8x8x16xf32>
    %180 = arith.mulf %176, %179 : vector<8x8x16xf32>
    %cst_40 = arith.constant dense<0.000000e+00> : vector<8x8xf32>
    %181 = vector.multi_reduction <add>, %180, %cst_40 [2] : vector<8x8x16xf32> to vector<8x8xf32>
    %182 = vector.shape_cast %181 : vector<8x8xf32> to vector<8x8x1xf32>
    %cst_41 = arith.constant dense<0xFF800000> : vector<8x1xf32>
    %183 = vector.multi_reduction <maximumf>, %182, %cst_41 [0] : vector<8x8x1xf32> to vector<8x1xf32>
    %184 = vector.shape_cast %183 : vector<8x1xf32> to vector<1x8x1xf32>
    %185 = vector.broadcast %184 : vector<1x8x1xf32> to vector<8x8x1xf32>
    %186 = arith.subf %182, %185 : vector<8x8x1xf32>
    %187 = math.exp %186 : vector<8x8x1xf32>
    %cst_42 = arith.constant dense<0.000000e+00> : vector<8x1xf32>
    %188 = vector.multi_reduction <add>, %187, %cst_42 [0] : vector<8x8x1xf32> to vector<8x1xf32>
    %189 = vector.shape_cast %188 : vector<8x1xf32> to vector<1x8x1xf32>
    %190 = vector.broadcast %189 : vector<1x8x1xf32> to vector<8x8x1xf32>
    %191 = arith.divf %187, %190 : vector<8x8x1xf32>
    %192 = vector.broadcast %191 : vector<8x8x1xf32> to vector<8x8x16xf32>
    %193 = arith.mulf %176, %192 : vector<8x8x16xf32>
    %cst_43 = arith.constant dense<0.000000e+00> : vector<8x16xf32>
    %194 = vector.multi_reduction <add>, %193, %cst_43 [0] : vector<8x8x16xf32> to vector<8x16xf32>
    %cst_44 = arith.constant dense<0.000000e+00> : vector<16xf32>
    %195 = vector.multi_reduction <add>, %194, %cst_44 [0] : vector<8x16xf32> to vector<16xf32>
    %196 = vector.shape_cast %195 : vector<16xf32> to vector<1x16xf32>
    %cst_45 = arith.constant 8.000000e+00 : f32
    %197 = vector.broadcast %cst_45 : f32 to vector<1x16xf32>
    %198 = arith.divf %196, %197 : vector<1x16xf32>
    %199 = vector.broadcast %198 : vector<1x16xf32> to vector<8x16xf32>
    %200 = arith.subf %194, %199 : vector<8x16xf32>
    %201 = arith.mulf %200, %200 : vector<8x16xf32>
    %cst_46 = arith.constant dense<0.000000e+00> : vector<16xf32>
    %202 = vector.multi_reduction <add>, %201, %cst_46 [0] : vector<8x16xf32> to vector<16xf32>
    %203 = vector.shape_cast %202 : vector<16xf32> to vector<1x16xf32>
    %cst_47 = arith.constant 8.000000e+00 : f32
    %204 = vector.broadcast %cst_47 : f32 to vector<1x16xf32>
    %205 = arith.divf %203, %204 : vector<1x16xf32>
    %206 = vector.broadcast %198 : vector<1x16xf32> to vector<8x16xf32>
    %207 = arith.subf %194, %206 : vector<8x16xf32>
    %cst_48 = arith.constant 9.99999974E-6 : f32
    %208 = vector.broadcast %cst_48 : f32 to vector<1x16xf32>
    %209 = arith.addf %205, %208 : vector<1x16xf32>
    %210 = math.rsqrt %209 : vector<1x16xf32>
    %211 = vector.broadcast %210 : vector<1x16xf32> to vector<8x16xf32>
    %212 = arith.mulf %207, %211 : vector<8x16xf32>
    %c2_49 = arith.constant 2 : index
    %c0_50 = arith.constant 0 : index
    %213 = vector.load %arg3[%c2_49, %c0_50] : memref<6x64xf32, #tpu.memory_space<vmem>>, vector<1x16xf32>
    %214 = vector.broadcast %213 : vector<1x16xf32> to vector<8x16xf32>
    %215 = arith.mulf %212, %214 : vector<8x16xf32>
    %c3_51 = arith.constant 3 : index
    %c0_52 = arith.constant 0 : index
    %216 = vector.load %arg3[%c3_51, %c0_52] : memref<6x64xf32, #tpu.memory_space<vmem>>, vector<1x16xf32>
    %217 = vector.broadcast %216 : vector<1x16xf32> to vector<8x16xf32>
    %218 = arith.addf %215, %217 : vector<8x16xf32>
    %cst_53 = arith.constant 0.000000e+00 : f32
    %219 = vector.broadcast %cst_53 : f32 to vector<8x16xf32>
    %220 = arith.maximumf %218, %219 : vector<8x16xf32>
    %c5_54 = arith.constant 5 : index
    %c0_55 = arith.constant 0 : index
    %221 = vector.load %arg3[%c5_54, %c0_55] : memref<6x64xf32, #tpu.memory_space<vmem>>, vector<1x16xf32>
    %c4_56 = arith.constant 4 : index
    %c0_57 = arith.constant 0 : index
    %222 = vector.load %arg3[%c4_56, %c0_57] : memref<6x64xf32, #tpu.memory_space<vmem>>, vector<1x1xf32>
    %223 = vector.broadcast %221 : vector<1x16xf32> to vector<8x16xf32>
    %224 = arith.mulf %220, %223 : vector<8x16xf32>
    %cst_58 = arith.constant dense<0.000000e+00> : vector<8xf32>
    %225 = vector.multi_reduction <add>, %224, %cst_58 [1] : vector<8x16xf32> to vector<8xf32>
    %226 = vector.shape_cast %225 : vector<8xf32> to vector<8x1xf32>
    %227 = vector.broadcast %222 : vector<1x1xf32> to vector<8x1xf32>
    %228 = arith.addf %226, %227 : vector<8x1xf32>
    %c0_59 = arith.constant 0 : index
    %c0_60 = arith.constant 0 : index
    %229 = vector.load %arg4[%c0_59, %c0_60] : memref<8x1xf32, #tpu.memory_space<vmem>>, vector<8x1xf32>
    tpu.vector_store %arg4[%c0_59, %c0_60], %228 {strides = array<i32>} : memref<8x1xf32, #tpu.memory_space<vmem>>, vector<8x1xf32>,
    return
  }
}

</mosaic_0001>

<llo_original>
// kernel: tpu_custom_call.1
$region0: #{tpu_custom_call.1}
  #allocation0 [shape = 'u32[]', space=smem, size = 0x4, offset = 0x4, fixed_abs, tag = 'smem constant byte address 0x4 - core index']
  #allocation1 [shape = 'u32[72,128]{1,0:T(1,128)}', space=vmem, size = 0x9000, scoped, tag = 'internal scratch']
  #allocation2 [shape = 'f32[8,8,16]{2,1,0:T(8,128)}', space=vmem, size = 0x8000, scoped, tag = 'scratch operand']
  %s0 = inlined_call_operand.hbm [shape: bf16[64,64], index: 0, kind: input, shape index: {}]
  %s1 = inlined_call_operand.hbm [shape: bf16[64,64], index: 1, kind: input, shape index: {}]
  %s2 = inlined_call_operand.hbm [shape: bf16[16,64], index: 2, kind: input, shape index: {}]
  %s3 = inlined_call_operand.hbm [shape: f32[6,64], index: 3, kind: input, shape index: {}]
  %s4 = inlined_call_operand.vmem [shape: f32[8,1], index: 4, kind: output, shape index: {}]
  %s5 = sld [smem:[#allocation0]]
  $region42: #{tpu_custom_call.1} parent=0
    _
  %s7 = ssub.s32 1, %s5
  %s8 = scalar_select 0, %s7, %s5
  $region1: #{tpu_custom_call.1} parent=0
    #allocation3 [shape = 'u8[16384]{0}', space=vmem, size = 0x4000, scoped, tag = 'input window, operand 0, single buffered']
    #allocation4 [shape = 's32[1]{0}', space=sflag, size = 0x4, scoped, tag = 'scoped memory for tpu_custom_call.1']
    #allocation5 [shape = 'u8[16384]{0}', space=vmem, size = 0x4000, scoped, tag = 'input window, operand 1, single buffered']
    #allocation6 [shape = 's32[1]{0}', space=sflag, size = 0x4, scoped, tag = 'scoped memory for tpu_custom_call.1']
    #allocation7 [shape = 'u8[4096]{0}', space=vmem, size = 0x1000, scoped, tag = 'input window, operand 2, single buffered']
    #allocation8 [shape = 'u8[4096]{0}', space=vmem, size = 0x1000, scoped, tag = 'input window, operand 3, single buffered']
    #allocation9 [shape = 's32[1]{0}', space=sflag, size = 0x4, scoped, tag = 'scoped memory for tpu_custom_call.1']
    %9 = vsyncpa [#allocation4], 0
    %10 = vsyncpa [#allocation6], 0
    %11 = vsyncpa [#allocation9], 0
    // Predicated region
    $region2: #{tpu_custom_call.1} parent=1 // pred_check
      _
    $region3: #{tpu_custom_call.1} parent=1 // pred_check_branch
      %13 = sbr.rel (0) target = $region5
    $region4: #{tpu_custom_call.1} parent=1 // pred_region
      %15 = vsyncadd [#allocation4], 0
      %s16 = sshll.u32 %s0, 4
      %s17 = int_to_ptr.hbm [resolvable:$true] %s16
      %s18 = sshll.u32 [#allocation3], 4
      %s19 = int_to_ptr.vmem [resolvable:$true] %s18
      %24 = dma.hbm_to_vmem [thread:$0]  %s17, 512, %s19, [#allocation4], 64, 64, 4
    $region5: #{tpu_custom_call.1} parent=1 // pred_fallthru
      _
    // Predicated region
    $region6: #{tpu_custom_call.1} parent=1 // pred_check
      _
    $region7: #{tpu_custom_call.1} parent=1 // pred_check_branch
      %26 = sbr.rel (0) target = $region9
    $region8: #{tpu_custom_call.1} parent=1 // pred_region
      %28 = vsyncadd [#allocation6], 0
      %s29 = sshll.u32 %s1, 4
      %s30 = int_to_ptr.hbm [resolvable:$true] %s29
      %s31 = sshll.u32 [#allocation5], 4
      %s32 = int_to_ptr.vmem [resolvable:$true] %s31
      %37 = dma.hbm_to_vmem [thread:$0]  %s30, 512, %s32, [#allocation6], 64, 64, 4
    $region9: #{tpu_custom_call.1} parent=1 // pred_fallthru
      _
    // Predicated region
    $region10: #{tpu_custom_call.1} parent=1 // pred_check
      _
    $region11: #{tpu_custom_call.1} parent=1 // pred_check_branch
      %39 = sbr.rel (0) target = $region13
    $region12: #{tpu_custom_call.1} parent=1 // pred_region
      %41 = vsyncadd [#allocation6], 0
      %s42 = sshll.u32 %s2, 4
      %s43 = int_to_ptr.hbm [resolvable:$true] %s42
      %s44 = sshll.u32 [#allocation7], 4
      %s45 = int_to_ptr.vmem [resolvable:$true] %s44
      %50 = dma.hbm_to_vmem [thread:$0]  %s43, 128, %s45, [#allocation6], 64, 64, 4
    $region13: #{tpu_custom_call.1} parent=1 // pred_fallthru
      _
    // Predicated region
    $region14: #{tpu_custom_call.1} parent=1 // pred_check
      _
    $region15: #{tpu_custom_call.1} parent=1 // pred_check_branch
      %52 = sbr.rel (0) target = $region17
    $region16: #{tpu_custom_call.1} parent=1 // pred_region
      %54 = vsyncadd [#allocation9], 0
      %s56 = sshll.u32 %s3, 4
      %s57 = int_to_ptr.hbm [resolvable:$true] %s56
      %s58 = sshll.u32 [#allocation8], 4
      %s59 = int_to_ptr.vmem [resolvable:$true] %s58
      %61 = dma.hbm_to_vmem [thread:$0]  %s57, 128, %s59, [#allocation9]
    $region17: #{tpu_custom_call.1} parent=1 // pred_fallthru
      _
    // Predicated region
    $region18: #{tpu_custom_call.1} parent=1 // pred_check
      _
    $region19: #{tpu_custom_call.1} parent=1 // pred_check_branch
      %63 = sbr.rel (0) target = $region21
    $region20: #{tpu_custom_call.1} parent=1 // pred_region
      %65 = dma.done [#allocation4], 512
    $region21: #{tpu_custom_call.1} parent=1 // pred_fallthru
      _
    // Predicated region
    $region22: #{tpu_custom_call.1} parent=1 // pred_check
      _
    $region23: #{tpu_custom_call.1} parent=1 // pred_check_branch
      %67 = sbr.rel (0) target = $region25
    $region24: #{tpu_custom_call.1} parent=1 // pred_region
      %69 = dma.done [#allocation6], 512
    $region25: #{tpu_custom_call.1} parent=1 // pred_fallthru
      _
    // Predicated region
    $region26: #{tpu_custom_call.1} parent=1 // pred_check
      _
    $region27: #{tpu_custom_call.1} parent=1 // pred_check_branch
      %71 = sbr.rel (0) target = $region29
    $region28: #{tpu_custom_call.1} parent=1 // pred_region
      %73 = dma.done [#allocation6], 128
    $region29: #{tpu_custom_call.1} parent=1 // pred_fallthru
      _
    // Predicated region
    $region30: #{tpu_custom_call.1} parent=1 // pred_check
      _
    $region31: #{tpu_custom_call.1} parent=1 // pred_check_branch
      %75 = sbr.rel (0) target = $region33
    $region32: #{tpu_custom_call.1} parent=1 // pred_region
      %77 = dma.done [#allocation9], 128
    $region33: #{tpu_custom_call.1} parent=1 // pred_fallthru
      _
    %v79 = vld [vmem:[#allocation8] sm:$0x1]
    %v80 = vld [vmem:[#allocation3] sm:$0xf]
    %v81 = vld [vmem:[#allocation3 + $0x4] sm:$0xf]
    %v82 = vld [vmem:[#allocation3 + $0x8] sm:$0xf]
    %v83 = vld [vmem:[#allocation3 + $0xc] sm:$0xf]
    %v84 = vld [vmem:[#allocation3 + $0x10] sm:$0xf]
    %v85 = vld [vmem:[#allocation3 + $0x14] sm:$0xf]
    %v86 = vld [vmem:[#allocation3 + $0x18] sm:$0xf]
    %v87 = vld [vmem:[#allocation3 + $0x1c] sm:$0xf]
    %v88 = vld [vmem:[#allocation5] sm:$0xf]
    %v89 = vld [vmem:[#allocation5 + $0x4] sm:$0xf]
    %v90 = vld [vmem:[#allocation5 + $0x8] sm:$0xf]
    %v91 = vld [vmem:[#allocation5 + $0xc] sm:$0xf]
    %v92 = vld [vmem:[#allocation5 + $0x10] sm:$0xf]
    %v93 = vld [vmem:[#allocation5 + $0x14] sm:$0xf]
    %v94 = vld [vmem:[#allocation5 + $0x18] sm:$0xf]
    %v95 = vld [vmem:[#allocation5 + $0x1c] sm:$0xf]
    %v96 = vperm.slane %v79, 0
    %v105 = vunpack.c.l.b16 %v80
    %v106 = vunpack.c.l.b16 %v81
    %v107 = vunpack.c.l.b16 %v82
    %v108 = vunpack.c.l.b16 %v83
    %v109 = vunpack.c.l.b16 %v84
    %v110 = vunpack.c.l.b16 %v85
    %v111 = vunpack.c.l.b16 %v86
    %v112 = vunpack.c.l.b16 %v87
    %v113 = vpack.c.b16 %v106, %v105
    %v114 = vpack.c.b16 %v108, %v107
    %v115 = vpack.c.b16 %v110, %v109
    %v116 = vpack.c.b16 %v112, %v111
    %v125 = vunpack.c.l.b16 %v88
    %v126 = vunpack.c.l.b16 %v89
    %v127 = vunpack.c.l.b16 %v90
    %v128 = vunpack.c.l.b16 %v91
    %v129 = vunpack.c.l.b16 %v92
    %v130 = vunpack.c.l.b16 %v93
    %v131 = vunpack.c.l.b16 %v94
    %v132 = vunpack.c.l.b16 %v95
    %v133 = vpack.c.b16 %v126, %v125
    %v134 = vpack.c.b16 %v128, %v127
    %v135 = vpack.c.b16 %v130, %v129
    %v136 = vpack.c.b16 %v132, %v131
    %vm141 = vcmask 523264
    %v143 = vsel %vm141, %v113, 0
    %v146 = vsel %vm141, %v114, 0
    %v149 = vsel %vm141, %v115, 0
    %v152 = vsel %vm141, %v116, 0
    %154 = vmatpush.bf16.msra.mxu0 0
    %155 = vmatpush.bf16.msra.mxu0 0
    %156 = vmatpush.bf16.msra.mxu0 0
    %157 = vmatpush.bf16.msra.mxu0 0
    %158 = vmatpush.bf16.msra.mxu0 %v136
    %159 = vmatpush.bf16.msra.mxu0 %v135
    %160 = vmatpush.bf16.msra.mxu0 %v134
    %161 = vmatpush.bf16.msra.mxu0 %v133
    %162 = vmatmul.bf16.gmra.mxu0 %v143
    %v163 = vpop.f32.mrf.mxu0
    %v164 = vadd.f32 %v96, %v163
    %v165 = vpop.f32.mrf.mxu0
    %v166 = vadd.f32 %v96, %v165
    %167 = vmatmul.bf16.gmra.mxu0 %v146
    %v168 = vpop.f32.mrf.mxu0
    %v169 = vadd.f32 %v96, %v168
    %v170 = vpop.f32.mrf.mxu0
    %v171 = vadd.f32 %v96, %v170
    %172 = vmatmul.bf16.gmra.mxu0 %v149
    %v173 = vpop.f32.mrf.mxu0
    %v174 = vadd.f32 %v96, %v173
    %v175 = vpop.f32.mrf.mxu0
    %v176 = vadd.f32 %v96, %v175
    %177 = vmatmul.bf16.gmra.mxu0 %v152
    %v178 = vpop.f32.mrf.mxu0
    %v179 = vadd.f32 %v96, %v178
    %v180 = vpop.f32.mrf.mxu0
    %v181 = vadd.f32 %v96, %v180
    %182 = vdwg.mxu0
    %v183 = vld [vmem:[#allocation7] sm:$0xf]
    %v184 = vld [vmem:[#allocation7 + $0x4] sm:$0xf]
    %v185 = vlaneseq
    %v186 = vand.u32 %v185, 127
    %vm187 = vcmp.ge.s32.totalorder %v186, 32
    %vm188 = vcmp.lt.s32.totalorder %v186, 48
    %vm189 = vmand %vm187, %vm188
    %v190 = vsel %vm189, 1.0, 0.5
    %v191 = vsel %vm189, 0.0, 0.5
    %vm192 = vcmp.lt.s32.totalorder %v186, 8
    %v193 = vtanh.pop %v164
    %v194 = vmul.f32 %v193, %v190
    %v195 = vadd.f32 %v194, %v191
    %197 = vrot.lane.b32.xlu0 %v195, 96
    %v198 = vpop.permute.xlu0 %197
    %v200 = vmul.f32 %v195, %v198
    %v201 = vtanh.pop %v200
    %203 = vrot.lane.b32.xlu0 %v201, 48
    %v204 = vpop.permute.xlu0 %203
    %v206 = vmul.f32 %v195, %v204
    %v207 = vpack.c.bf16 %v206, %v206
    %209 = vrot.lane.b32.xlu0 %v207, 80
    %v210 = vpop.permute.xlu0 %209
    %v213 = vunpack.c.l.b16 %v183
    %v214 = vunpack.c.l.b16 %v184
    %v215 = vpack.c.b16 %v214, %v213
    %vm217 = vcmask 130048
    %v219 = vsel %vm217, %v210, 0
    %221 = vmatpush.bf16.msra.mxu0 0
    %222 = vmatpush.bf16.msra.mxu0 0
    %223 = vmatpush.bf16.msra.mxu0 0
    %224 = vmatpush.bf16.msra.mxu0 0
    %225 = vmatpush.bf16.msra.mxu0 0
    %226 = vmatpush.bf16.msra.mxu0 0
    %227 = vmatpush.bf16.msra.mxu0 0
    %228 = vmatpush.bf16.msra.mxu0 %v215
    %229 = vmatmul.bf16.gmra.mxu0 %v219
    %v230 = vpop.f32.mrf.mxu0
    %v231 = vadd.f32 0.0, %v230
    %v232 = vpop.f32.mrf.mxu0
    %233 = vdwg.mxu0
    %v234 = vadd.f32 %v166, %v231
    %v235 = vtanh.pop %v234
    %v236 = vmul.f32 %v235, %v190
    %v237 = vadd.f32 %v236, %v191
    %239 = vrot.lane.b32.xlu0 %v200, 16
    %v240 = vpop.permute.xlu0 %239
    %v242 = vmul.f32 %v237, %v240
    %244 = vrot.lane.b32.xlu0 %v237, 96
    %v245 = vpop.permute.xlu0 %244
    %v247 = vmul.f32 %v237, %v245
    %249 = vrot.lane.b32.xlu0 %v247, 16
    %v250 = vpop.permute.xlu0 %249
    %v252 = vadd.f32 %v242, %v250
    %v253 = vtanh.pop %v252
    %255 = vrot.lane.b32.xlu0 %v253, 32
    %v256 = vpop.permute.xlu0 %255
    %v258 = vmul.f32 %v237, %v256
    %v259 = vpack.c.bf16 %v258, %v258
    %261 = vrot.lane.b32.xlu0 %v259, 80
    %v262 = vpop.permute.xlu0 %261
    %v264 = vsel %vm217, %v262, 0
    %266 = vmatpush.bf16.msra.mxu0 0
    %267 = vmatpush.bf16.msra.mxu0 0
    %268 = vmatpush.bf16.msra.mxu0 0
    %269 = vmatpush.bf16.msra.mxu0 0
    %270 = vmatpush.bf16.msra.mxu0 0
    %271 = vmatpush.bf16.msra.mxu0 0
    %272 = vmatpush.bf16.msra.mxu0 0
    %273 = vmatpush.bf16.msra.mxu0 %v215
    %274 = vmatmul.bf16.gmra.mxu0 %v264
    %v275 = vpop.f32.mrf.mxu0
    %v276 = vadd.f32 0.0, %v275
    %v277 = vpop.f32.mrf.mxu0
    %278 = vdwg.mxu0
    %v279 = vadd.f32 %v169, %v276
    %v280 = vtanh.pop %v279
    %v281 = vmul.f32 %v280, %v190
    %v282 = vadd.f32 %v281, %v191
    %v283 = vmul.f32 %v282, %v252
    %285 = vrot.lane.b32.xlu0 %v282, 96
    %v286 = vpop.permute.xlu0 %285
    %v288 = vmul.f32 %v282, %v286
    %290 = vrot.lane.b32.xlu0 %v288, 16
    %v291 = vpop.permute.xlu0 %290
    %v293 = vadd.f32 %v283, %v291
    %v294 = vtanh.pop %v293
    %296 = vrot.lane.b32.xlu0 %v294, 32
    %v297 = vpop.permute.xlu0 %296
    %v299 = vmul.f32 %v282, %v297
    %v300 = vpack.c.bf16 %v299, %v299
    %302 = vrot.lane.b32.xlu0 %v300, 80
    %v303 = vpop.permute.xlu0 %302
    %v305 = vsel %vm217, %v303, 0
    %307 = vmatpush.bf16.msra.mxu0 0
    %308 = vmatpush.bf16.msra.mxu0 0
    %309 = vmatpush.bf16.msra.mxu0 0
    %310 = vmatpush.bf16.msra.mxu0 0
    %311 = vmatpush.bf16.msra.mxu0 0
    %312 = vmatpush.bf16.msra.mxu0 0
    %313 = vmatpush.bf16.msra.mxu0 0
    %314 = vmatpush.bf16.msra.mxu0 %v215
    %315 = vmatmul.bf16.gmra.mxu0 %v305
    %v316 = vpop.f32.mrf.mxu0
    %v317 = vadd.f32 0.0, %v316
    %v318 = vpop.f32.mrf.mxu0
    %319 = vdwg.mxu0
    %v320 = vadd.f32 %v171, %v317
    %v321 = vtanh.pop %v320
    %v322 = vmul.f32 %v321, %v190
    %v323 = vadd.f32 %v322, %v191
    %v324 = vmul.f32 %v323, %v293
    %326 = vrot.lane.b32.xlu0 %v323, 96
    %v327 = vpop.permute.xlu0 %326
    %v329 = vmul.f32 %v323, %v327
    %331 = vrot.lane.b32.xlu0 %v329, 16
    %v332 = vpop.permute.xlu0 %331
    %v334 = vadd.f32 %v324, %v332
    %v335 = vtanh.pop %v334
    %337 = vrot.lane.b32.xlu0 %v335, 32
    %v338 = vpop.permute.xlu0 %337
    %v340 = vmul.f32 %v323, %v338
    %v341 = vpack.c.bf16 %v340, %v340
    %343 = vrot.lane.b32.xlu0 %v341, 80
    %v344 = vpop.permute.xlu0 %343
    %v346 = vsel %vm217, %v344, 0
    %348 = vmatpush.bf16.msra.mxu0 0
    %349 = vmatpush.bf16.msra.mxu0 0
    %350 = vmatpush.bf16.msra.mxu0 0
    %351 = vmatpush.bf16.msra.mxu0 0
    %352 = vmatpush.bf16.msra.mxu0 0
    %353 = vmatpush.bf16.msra.mxu0 0
    %354 = vmatpush.bf16.msra.mxu0 0
    %355 = vmatpush.bf16.msra.mxu0 %v215
    %356 = vmatmul.bf16.gmra.mxu0 %v346
    %v357 = vpop.f32.mrf.mxu0
    %v358 = vadd.f32 0.0, %v357
    %v359 = vpop.f32.mrf.mxu0
    %360 = vdwg.mxu0
    %v361 = vadd.f32 %v174, %v358
    %v362 = vtanh.pop %v361
    %v363 = vmul.f32 %v362, %v190
    %v364 = vadd.f32 %v363, %v191
    %v365 = vmul.f32 %v364, %v334
    %367 = vrot.lane.b32.xlu0 %v364, 96
    %v368 = vpop.permute.xlu0 %367
    %v370 = vmul.f32 %v364, %v368
    %372 = vrot.lane.b32.xlu0 %v370, 16
    %v373 = vpop.permute.xlu0 %372
    %v375 = vadd.f32 %v365, %v373
    %v376 = vtanh.pop %v375
    %378 = vrot.lane.b32.xlu0 %v376, 32
    %v379 = vpop.permute.xlu0 %378
    %v381 = vmul.f32 %v364, %v379
    %v382 = vpack.c.bf16 %v381, %v381
    %384 = vrot.lane.b32.xlu0 %v382, 80
    %v385 = vpop.permute.xlu0 %384
    %v387 = vsel %vm217, %v385, 0
    %389 = vmatpush.bf16.msra.mxu0 0
    %390 = vmatpush.bf16.msra.mxu0 0
    %391 = vmatpush.bf16.msra.mxu0 0
    %392 = vmatpush.bf16.msra.mxu0 0
    %393 = vmatpush.bf16.msra.mxu0 0
    %394 = vmatpush.bf16.msra.mxu0 0
    %395 = vmatpush.bf16.msra.mxu0 0
    %396 = vmatpush.bf16.msra.mxu0 %v215
    %397 = vmatmul.bf16.gmra.mxu0 %v387
    %v398 = vpop.f32.mrf.mxu0
    %v399 = vadd.f32 0.0, %v398
    %v400 = vpop.f32.mrf.mxu0
    %401 = vdwg.mxu0
    %v402 = vadd.f32 %v176, %v399
    %v403 = vtanh.pop %v402
    %v404 = vmul.f32 %v403, %v190
    %v405 = vadd.f32 %v404, %v191
    %v406 = vmul.f32 %v405, %v375
    %408 = vrot.lane.b32.xlu0 %v405, 96
    %v409 = vpop.permute.xlu0 %408
    %v411 = vmul.f32 %v405, %v409
    %413 = vrot.lane.b32.xlu0 %v411, 16
    %v414 = vpop.permute.xlu0 %413
    %v416 = vadd.f32 %v406, %v414
    %v417 = vtanh.pop %v416
    %419 = vrot.lane.b32.xlu0 %v417, 32
    %v420 = vpop.permute.xlu0 %419
    %v422 = vmul.f32 %v405, %v420
    %v423 = vpack.c.bf16 %v422, %v422
    %425 = vrot.lane.b32.xlu0 %v423, 80
    %v426 = vpop.permute.xlu0 %425
    %v428 = vsel %vm217, %v426, 0
    %430 = vmatpush.bf16.msra.mxu0 0
    %431 = vmatpush.bf16.msra.mxu0 0
    %432 = vmatpush.bf16.msra.mxu0 0
    %433 = vmatpush.bf16.msra.mxu0 0
    %434 = vmatpush.bf16.msra.mxu0 0
    %435 = vmatpush.bf16.msra.mxu0 0
    %436 = vmatpush.bf16.msra.mxu0 0
    %437 = vmatpush.bf16.msra.mxu0 %v215
    %438 = vmatmul.bf16.gmra.mxu0 %v428
    %v439 = vpop.f32.mrf.mxu0
    %v440 = vadd.f32 0.0, %v439
    %v441 = vpop.f32.mrf.mxu0
    %442 = vdwg.mxu0
    %v443 = vadd.f32 %v179, %v440
    %v444 = vtanh.pop %v443
    %v445 = vmul.f32 %v444, %v190
    %v446 = vadd.f32 %v445, %v191
    %v447 = vmul.f32 %v446, %v416
    %449 = vrot.lane.b32.xlu0 %v446, 96
    %v450 = vpop.permute.xlu0 %449
    %v452 = vmul.f32 %v446, %v450
    %454 = vrot.lane.b32.xlu0 %v452, 16
    %v455 = vpop.permute.xlu0 %454
    %v457 = vadd.f32 %v447, %v455
    %v458 = vtanh.pop %v457
    %460 = vrot.lane.b32.xlu0 %v458, 32
    %v461 = vpop.permute.xlu0 %460
    %v463 = vmul.f32 %v446, %v461
    %v464 = vpack.c.bf16 %v463, %v463
    %466 = vrot.lane.b32.xlu0 %v464, 80
    %v467 = vpop.permute.xlu0 %466
    %v469 = vsel %vm217, %v467, 0
    %471 = vmatpush.bf16.msra.mxu0 0
    %472 = vmatpush.bf16.msra.mxu0 0
    %473 = vmatpush.bf16.msra.mxu0 0
    %474 = vmatpush.bf16.msra.mxu0 0
    %475 = vmatpush.bf16.msra.mxu0 0
    %476 = vmatpush.bf16.msra.mxu0 0
    %477 = vmatpush.bf16.msra.mxu0 0
    %478 = vmatpush.bf16.msra.mxu0 %v215
    %479 = vmatmul.bf16.gmra.mxu0 %v469
    %v480 = vpop.f32.mrf.mxu0
    %v481 = vadd.f32 0.0, %v480
    %v482 = vpop.f32.mrf.mxu0
    %483 = vdwg.mxu0
    %v484 = vadd.f32 %v181, %v481
    %v485 = vtanh.pop %v484
    %v486 = vmul.f32 %v485, %v190
    %v487 = vadd.f32 %v486, %v191
    %v488 = vmul.f32 %v487, %v457
    %490 = vrot.lane.b32.xlu0 %v487, 96
    %v491 = vpop.permute.xlu0 %490
    %v493 = vmul.f32 %v487, %v491
    %495 = vrot.lane.b32.xlu0 %v493, 16
    %v496 = vpop.permute.xlu0 %495
    %v498 = vadd.f32 %v488, %v496
    %v499 = vtanh.pop %v498
    %501 = vrot.lane.b32.xlu0 %v499, 32
    %v502 = vpop.permute.xlu0 %501
    %v504 = vmul.f32 %v487, %v502
    %506 = vrot.lane.b32.xlu0 %v206, 80
    %v507 = vpop.permute.xlu0 %506
    %510 = vrot.lane.b32.xlu0 %v504, 80
    %v511 = vpop.permute.xlu0 %510
    %v513 = vsel %vm192, %v507, %v511
    %514 = vst.msk [vmem:[#allocation2] sm:$0xff] %vm217, %v513
    %516 = vrot.lane.b32.xlu0 %v258, 80
    %v517 = vpop.permute.xlu0 %516
    %520 = vrot.lane.b32.xlu0 %v463, 80
    %v521 = vpop.permute.xlu0 %520
    %v523 = vsel %vm192, %v517, %v521
    %s524 = scalar_lea.vmem [#allocation2], 8
    %525 = vst.msk [vmem:[%s524] sm:$0xff] %vm217, %v523
    %527 = vrot.lane.b32.xlu0 %v299, 80
    %v528 = vpop.permute.xlu0 %527
    %531 = vrot.lane.b32.xlu0 %v422, 80
    %v532 = vpop.permute.xlu0 %531
    %v534 = vsel %vm192, %v528, %v532
    %s535 = scalar_lea.vmem [#allocation2], 16
    %536 = vst.msk [vmem:[%s535] sm:$0xff] %vm217, %v534
    %538 = vrot.lane.b32.xlu0 %v340, 80
    %v539 = vpop.permute.xlu0 %538
    %542 = vrot.lane.b32.xlu0 %v381, 80
    %v543 = vpop.permute.xlu0 %542
    %v545 = vsel %vm192, %v539, %v543
    %s546 = scalar_lea.vmem [#allocation2], 24
    %547 = vst.msk [vmem:[%s546] sm:$0xff] %vm217, %v545
    %v548 = vsel %vm192, %v543, %v539
    %s549 = scalar_lea.vmem [#allocation2], 32
    %550 = vst.msk [vmem:[%s549] sm:$0xff] %vm217, %v548
    %v551 = vsel %vm192, %v532, %v528
    %s552 = scalar_lea.vmem [#allocation2], 40
    %553 = vst.msk [vmem:[%s552] sm:$0xff] %vm217, %v551
    %v554 = vsel %vm192, %v521, %v517
    %s555 = scalar_lea.vmem [#allocation2], 48
    %556 = vst.msk [vmem:[%s555] sm:$0xff] %vm217, %v554
    %v557 = vsel %vm192, %v511, %v507
    %s558 = scalar_lea.vmem [#allocation2], 56
    %559 = vst.msk [vmem:[%s558] sm:$0xff] %vm217, %v557
    %v560 = vld [vmem:[#allocation2] sm:$0xff]
    %v561 = vld [vmem:[#allocation2 + $0x8] sm:$0xff]
    %v562 = vld [vmem:[#allocation2 + $0x10] sm:$0xff]
    %v563 = vld [vmem:[#allocation2 + $0x18] sm:$0xff]
    %v564 = vld [vmem:[#allocation2 + $0x20] sm:$0xff]
    %v565 = vld [vmem:[#allocation2 + $0x28] sm:$0xff]
    %v566 = vld [vmem:[#allocation2 + $0x30] sm:$0xff]
    %v567 = vld [vmem:[#allocation2 + $0x38] sm:$0xff]
    %v568 = vld [vmem:[#allocation8 + $0x1] sm:$0x1]
    %v569 = vperm.slane %v568, 0
    %v570 = vmul.f32 %v560, %v569
    %v571 = vmul.f32 %v561, %v569
    %v572 = vmul.f32 %v562, %v569
    %v573 = vmul.f32 %v563, %v569
    %v574 = vmul.f32 %v564, %v569
    %v575 = vmul.f32 %v565, %v569
    %v576 = vmul.f32 %v566, %v569
    %v577 = vmul.f32 %v567, %v569
    %v578 = vsel %vm217, %v570, 0.0
    %579 = vadd.xlane.f32.xlu0 %v578
    %v580 = vpop.xlane.xlu0 %579
    %v581 = vsel %vm217, %v571, 0.0
    %582 = vadd.xlane.f32.xlu0 %v581
    %v583 = vpop.xlane.xlu0 %582
    %v584 = vsel %vm217, %v572, 0.0
    %585 = vadd.xlane.f32.xlu0 %v584
    %v586 = vpop.xlane.xlu0 %585
    %v587 = vsel %vm217, %v573, 0.0
    %588 = vadd.xlane.f32.xlu0 %v587
    %v589 = vpop.xlane.xlu0 %588
    %v590 = vsel %vm217, %v574, 0.0
    %591 = vadd.xlane.f32.xlu0 %v590
    %v592 = vpop.xlane.xlu0 %591
    %v593 = vsel %vm217, %v575, 0.0
    %594 = vadd.xlane.f32.xlu0 %v593
    %v595 = vpop.xlane.xlu0 %594
    %v596 = vsel %vm217, %v576, 0.0
    %597 = vadd.xlane.f32.xlu0 %v596
    %v598 = vpop.xlane.xlu0 %597
    %v599 = vsel %vm217, %v577, 0.0
    %600 = vadd.xlane.f32.xlu0 %v599
    %v601 = vpop.xlane.xlu0 %600
    %v602 = vmax.f32 %v580, %v592
    %v603 = vmax.f32 %v583, %v595
    %v604 = vmax.f32 %v586, %v598
    %v605 = vmax.f32 %v589, %v601
    %v606 = vmax.f32 %v602, %v603
    %v607 = vmax.f32 %v604, %v605
    %v608 = vmax.f32 %v606, %v607
    %v609 = vsub.f32 %v580, %v608
    %v610 = vsub.f32 %v583, %v608
    %v611 = vsub.f32 %v586, %v608
    %v612 = vsub.f32 %v589, %v608
    %v613 = vsub.f32 %v592, %v608
    %v614 = vsub.f32 %v595, %v608
    %v615 = vsub.f32 %v598, %v608
    %v616 = vsub.f32 %v601, %v608
    %v617 = vmul.f32 %v609, 1.442695
    %v618 = vpow.pop %v617
    %v619 = vmul.f32 %v610, 1.442695
    %v620 = vpow.pop %v619
    %v621 = vmul.f32 %v611, 1.442695
    %v622 = vpow.pop %v621
    %v623 = vmul.f32 %v612, 1.442695
    %v624 = vpow.pop %v623
    %v625 = vmul.f32 %v613, 1.442695
    %v626 = vpow.pop %v625
    %v627 = vmul.f32 %v614, 1.442695
    %v628 = vpow.pop %v627
    %v629 = vmul.f32 %v615, 1.442695
    %v630 = vpow.pop %v629
    %v631 = vmul.f32 %v616, 1.442695
    %v632 = vpow.pop %v631
    %v633 = vadd.f32 %v618, %v620
    %v634 = vadd.f32 %v633, %v622
    %v635 = vadd.f32 %v634, %v624
    %v636 = vadd.f32 %v635, %v626
    %v637 = vadd.f32 %v636, %v628
    %v638 = vadd.f32 %v637, %v630
    %v639 = vadd.f32 %v638, %v632
    %v640 = vrcp.pop %v639
    %v641 = vmul.f32 %v639, %v640
    %v642 = vsub.f32 1.0, %v641
    %v643 = vmul.f32 %v640, %v642
    %v644 = vadd.f32 %v640, %v643
    %vm645 = vweird.f32 %v639
    %vm646 = vweird.f32 %v640
    %vm647 = vmor %vm645, %vm646
    %v648 = vsel %vm647, %v640, %v644
    %v649 = vand.u32 2147483647, %v639
    %vm650 = vcmp.eq.f32.partialorder %v649, 8.507059e+37
    %v651 = vand.u32 %v639, 2147483648
    %v652 = vor.u32 1.1754944e-38, %v651
    %v653 = vsel %vm650, %v652, %v648
    %v654 = vmul.f32 %v618, %v653
    %v655 = vmul.f32 %v620, %v653
    %v656 = vmul.f32 %v622, %v653
    %v657 = vmul.f32 %v624, %v653
    %v658 = vmul.f32 %v626, %v653
    %v659 = vmul.f32 %v628, %v653
    %v660 = vmul.f32 %v630, %v653
    %v661 = vmul.f32 %v632, %v653
    %v662 = vmul.f32 %v560, %v654
    %v663 = vmul.f32 %v561, %v655
    %v664 = vmul.f32 %v562, %v656
    %v665 = vmul.f32 %v563, %v657
    %v666 = vmul.f32 %v564, %v658
    %v667 = vmul.f32 %v565, %v659
    %v668 = vmul.f32 %v566, %v660
    %v669 = vmul.f32 %v567, %v661
    %v670 = vsel %vm217, %v662, 0.0
    %v671 = vsel %vm217, %v663, 0.0
    %v672 = vadd.f32 %v670, %v671
    %v673 = vsel %vm217, %v664, 0.0
    %v674 = vadd.f32 %v672, %v673
    %v675 = vsel %vm217, %v665, 0.0
    %v676 = vadd.f32 %v674, %v675
    %v677 = vsel %vm217, %v666, 0.0
    %v678 = vadd.f32 %v676, %v677
    %v679 = vsel %vm217, %v667, 0.0
    %v680 = vadd.f32 %v678, %v679
    %v681 = vsel %vm217, %v668, 0.0
    %v682 = vadd.f32 %v680, %v681
    %v683 = vsel %vm217, %v669, 0.0
    %v684 = vadd.f32 %v682, %v683
    %v685 = vsel %vm217, %v684, 0.0
    %v686 = vrot.slane %v685, 4
    %v687 = vadd.f32 %v685, %v686
    %v688 = vrot.slane %v687, 2
    %v689 = vadd.f32 %v687, %v688
    %v690 = vrot.slane %v689, 1
    %v691 = vadd.f32 %v689, %v690
    %v692 = vrcp.pop 8.0
    %v693 = vmul.f32 8.0, %v692
    %v694 = vsub.f32 1.0, %v693
    %v695 = vmul.f32 %v692, %v694
    %v696 = vadd.f32 %v692, %v695
    %vm697 = vweird.f32 %v692
    %v698 = vsel %vm697, %v692, %v696
    %v699 = vmul.f32 %v691, %v698
    %v700 = vsub.f32 %v684, %v699
    %v701 = vmul.f32 %v700, %v700
    %v702 = vsel %vm217, %v701, 0.0
    %v703 = vrot.slane %v702, 4
    %v704 = vadd.f32 %v702, %v703
    %v705 = vrot.slane %v704, 2
    %v706 = vadd.f32 %v704, %v705
    %v707 = vrot.slane %v706, 1
    %v708 = vadd.f32 %v706, %v707
    %v709 = vmul.f32 %v708, %v698
    %v710 = vadd.f32 %v709, 1e-05
    %v711 = vrsqrt.pop %v710
    %v712 = vmul.f32 %v711, %v710
    %v713 = vmul.f32 %v712, %v711
    %v714 = vmul.f32 0.5, %v713
    %v715 = vsub.f32 1.5, %v714
    %v716 = vmul.f32 %v711, %v715
    %vm717 = vweird.f32 %v710
    %vm718 = vweird.f32 %v711
    %vm719 = vmor %vm717, %vm718
    %v720 = vsel %vm719, %v711, %v716
    %v721 = vmul.f32 %v700, %v720
    %v722 = vld [vmem:[#allocation8 + $0x2] sm:$0x1]
    %v723 = vperm.slane %v722, 0
    %v724 = vmul.f32 %v721, %v723
    %v725 = vld [vmem:[#allocation8 + $0x3] sm:$0x1]
    %v726 = vperm.slane %v725, 0
    %v727 = vadd.f32 %v724, %v726
    %v728 = vmax.f32 %v727, 0.0
    %v729 = vld [vmem:[#allocation8 + $0x5] sm:$0x1]
    %v730 = vld [vmem:[#allocation8 + $0x4] sm:$0x1]
    %v731 = vperm.slane %v729, 0
    %v732 = vmul.f32 %v728, %v731
    %v733 = vsel %vm217, %v732, 0.0
    %734 = vadd.xlane.f32.xlu0 %v733
    %v735 = vpop.xlane.xlu0 %734
    %v736 = vperm.slane %v730, 0
    %v737 = vadd.f32 %v735, %v736
    %vm738 = vcmask 7168
    %739 = vst.msk [vmem:[%s4] sm:$0xff] %vm738, %v737
    // Predicated region
    $region34: #{tpu_custom_call.1} parent=1 // pred_check
      _
    $region35: #{tpu_custom_call.1} parent=1 // pred_check_branch
      %741 = sbr.rel (0) target = $region37
    $region36: #{tpu_custom_call.1} parent=1 // pred_region
      _
    $region37: #{tpu_custom_call.1} parent=1 // pred_fallthru
      _
    // Predicated region
    $region38: #{tpu_custom_call.1} parent=1 // pred_check
      _
    $region39: #{tpu_custom_call.1} parent=1 // pred_check_branch
      %743 = sbr.rel (0) target = $region41
    $region40: #{tpu_custom_call.1} parent=1 // pred_region
      _
    $region41: #{tpu_custom_call.1} parent=1 // pred_fallthru
      _
    %744 = vsyncpa [#allocation4], 1
    %745 = vsyncpa [#allocation6], 1
    %746 = vsyncpa [#allocation9], 1

</llo_original>
